<compile_context>
chip_gen: v7x
topology: tpu7x:2x2x1
jax: 0.10.0
libtpu: 0.0.40
codegen_flags: <defaults>
</compile_context>

<pallas_src>
import functools

import jax
import jax.numpy as jnp
from jax.experimental import pallas as pl
from jax.experimental.pallas import tpu as pltpu

MARGIN = 1.0
EPS = 1e-6  # PyTorch pairwise_distance eps (added to the difference)


def _triplet_kernel(a_ref, p_ref, n_ref, o_ref, *, n_rows, tile_rows, margin, ragged):
    a = a_ref[...]
    p = p_ref[...]
    n = n_ref[...]
    if a.dtype != jnp.float32:  # keep f32 math for bf16 inputs; no-op for f32
        a = a.astype(jnp.float32)
        p = p.astype(jnp.float32)
        n = n.astype(jnp.float32)

    # p=2 norm of (x - y + eps) along the feature (lane) axis.
    dap = jnp.sqrt(jnp.sum((a - p + EPS) ** 2, axis=-1, keepdims=True))  # (TN, 1)
    dan = jnp.sqrt(jnp.sum((a - n + EPS) ** 2, axis=-1, keepdims=True))  # (TN, 1)
    per_sample = jnp.maximum(dap - dan + margin, 0.0)                    # (TN, 1)

    if not ragged:
        # Evenly divisible batch: no masking work at all, one store per tile.
        o_ref[...] = jnp.sum(per_sample, keepdims=True)
    else:
        i = pl.program_id(0)
        last = pl.num_programs(0) - 1

        @pl.when(i != last)
        def _full_tile():
            o_ref[...] = jnp.sum(per_sample, keepdims=True)

        @pl.when(i == last)
        def _ragged_tile():
            # Only the last tile pays for the iota/compare/select. jnp.where is a
            # true select, so garbage (even NaN/Inf) in padded rows cannot leak.
            row = jax.lax.broadcasted_iota(jnp.int32, (tile_rows, 1), 0) + i * tile_rows
            masked = jnp.where(row < n_rows, per_sample, 0.0)
            o_ref[...] = jnp.sum(masked, keepdims=True)


def _vmem_capacity_bytes():
    """Physical VMEM per TensorCore, with a safe fallback."""
    try:
        info = pltpu.get_tpu_info()
        cap = getattr(info, "vmem_capacity_bytes", None)
        if cap:
            return int(cap)
    except Exception:
        pass
    return 128 << 20  # v5e/v6e


def _vmem_budget_bytes(capacity_bytes):
    """Budget for the double-buffered 3-input DMA windows, per TPU generation."""
    if capacity_bytes <= (64 << 20):
        # v7x: only 64 MiB VMEM per TC — cap the windows at ~44 MiB.
        return 44 << 20
    # v5e/v6e: 128 MiB physical — use ~96 MiB so per-step overhead is negligible.
    return 96 << 20


def _choose_tile_rows(n, d, itemsize, vmem_budget_bytes):
    """Largest row tile whose double-buffered 3-input footprint fits the budget."""
    d_lanes = max(128, ((d + 127) // 128) * 128)   # lane padding of the last dim in VMEM
    bytes_per_row = 3 * 2 * d_lanes * itemsize     # 3 inputs x 2 pipeline buffers
    tn = int(vmem_budget_bytes // bytes_per_row)
    tn = max(8, (tn // 8) * 8)                     # sublane multiple, no artificial clamp
    if tn >= n:
        return n                                   # single full-extent tile
    return tn


def triplet_loss(anchor, positive, negative, *, margin=MARGIN, tile_rows=None):
    assert anchor.shape == positive.shape == negative.shape
    assert anchor.ndim == 2
    N, D = anchor.shape
    itemsize = jnp.dtype(anchor.dtype).itemsize

    capacity = _vmem_capacity_bytes()
    budget = _vmem_budget_bytes(capacity)
    if tile_rows is None:
        tile_rows = _choose_tile_rows(N, D, itemsize, budget)
    tile_rows = min(tile_rows, N)
    if tile_rows < N:
        assert tile_rows % 8 == 0, "row tile must be a sublane multiple"
    num_tiles = pl.cdiv(N, tile_rows)
    ragged = (N % tile_rows) != 0

    d_lanes = max(128, ((D + 127) // 128) * 128)
    window_bytes = 3 * 2 * tile_rows * d_lanes * itemsize
    vmem_limit = int(min(capacity, window_bytes + (8 << 20)))

    kernel = functools.partial(
        _triplet_kernel, n_rows=N, tile_rows=tile_rows,
        margin=float(margin), ragged=ragged)

    in_spec = pl.BlockSpec((tile_rows, D), lambda i: (i, 0))
    partials = pl.pallas_call(
        kernel,
        out_shape=jax.ShapeDtypeStruct((num_tiles, 1), jnp.float32),
        grid_spec=pltpu.PrefetchScalarGridSpec(
            num_scalar_prefetch=0,
            grid=(num_tiles,),
            in_specs=[in_spec, in_spec, in_spec],
            out_specs=pl.BlockSpec((1, 1), lambda i: (i, 0)),
        ),
        compiler_params=pltpu.CompilerParams(
            dimension_semantics=("parallel",),
            vmem_limit_bytes=vmem_limit),
        cost_estimate=pl.CostEstimate(
            flops=8 * N * D,
            transcendentals=2 * N,
            bytes_accessed=3 * N * D * itemsize + 4 * num_tiles),
    )(anchor, positive, negative)

    # Tree-reduce the per-tile partial sums in the wrapper (fast; also avoids the
    # long sequential-add drift of a single cross-step accumulator for huge N).
    return jnp.sum(partials) / N


def _triplet_loss_ref(anchor, positive, negative, margin=MARGIN):
    # Pure-JAX reference mirroring PyTorch TripletMarginLoss defaults.
    dap = jnp.sqrt(jnp.sum((anchor - positive + EPS) ** 2, axis=-1))
    dan = jnp.sqrt(jnp.sum((anchor - negative + EPS) ** 2, axis=-1))
    return jnp.mean(jnp.maximum(dap - dan + margin, 0.0))


if __name__ == "__main__":
    # Small shape consistent with the module's forward (batch of embedding triplets).
    k1, k2, k3 = jax.random.split(jax.random.PRNGKey(0), 3)
    N, D = 8, 32
    anchor = jax.random.normal(k1, (N, D), dtype=jnp.float32)
    positive = jax.random.normal(k2, (N, D), dtype=jnp.float32)
    negative = jax.random.normal(k3, (N, D), dtype=jnp.float32)

    out = triplet_loss(anchor, positive, negative)
    jax.block_until_ready(out)
    ref = _triplet_loss_ref(anchor, positive, negative)
    assert jnp.allclose(out, ref, rtol=1e-5, atol=1e-5), (out, ref)

    # Exercise the multi-tile per-tile-partial path and ragged-last-tile masking.
    k4, k5, k6 = jax.random.split(jax.random.PRNGKey(1), 3)
    N2, D2 = 200, 128
    a2 = jax.random.normal(k4, (N2, D2), dtype=jnp.float32)
    p2 = jax.random.normal(k5, (N2, D2), dtype=jnp.float32)
    n2 = jax.random.normal(k6, (N2, D2), dtype=jnp.float32)
    out2 = triplet_loss(a2, p2, n2, tile_rows=64)
    jax.block_until_ready(out2)
    ref2 = _triplet_loss_ref(a2, p2, n2)
    assert jnp.allclose(out2, ref2, rtol=1e-5, atol=1e-5), (out2, ref2)

    print("KERNEL_OK")
</pallas_src>

<mosaic_0001>
module attributes {stable_mosaic.version = 11 : i64} {
  func.func @_triplet_kernel(%arg0: i32, %arg1: memref<8x32xf32, #tpu.memory_space<vmem>>, %arg2: memref<8x32xf32, #tpu.memory_space<vmem>>, %arg3: memref<8x32xf32, #tpu.memory_space<vmem>>, %arg4: memref<1x1xf32, #tpu.memory_space<vmem>>) attributes {dimension_semantics = [#tpu.dimension_semantics<parallel>], iteration_bounds = array<i64: 1>, scalar_prefetch = 0 : i64, scratch_operands = 0 : i64, tpu.core_type = #tpu.core_type<tc>, window_params = [{transform_indices = @transform_0, window_bounds = array<i64: 8, 32>}, {transform_indices = @transform_1, window_bounds = array<i64: 8, 32>}, {transform_indices = @transform_2, window_bounds = array<i64: 8, 32>}, {transform_indices = @transform_3, window_bounds = array<i64: 1, 1>}]} {
    %c0 = arith.constant 0 : index
    %c0_0 = arith.constant 0 : index
    %0 = vector.load %arg1[%c0, %c0_0] : memref<8x32xf32, #tpu.memory_space<vmem>>, vector<8x32xf32>
    %c0_1 = arith.constant 0 : index
    %c0_2 = arith.constant 0 : index
    %1 = vector.load %arg2[%c0_1, %c0_2] : memref<8x32xf32, #tpu.memory_space<vmem>>, vector<8x32xf32>
    %c0_3 = arith.constant 0 : index
    %c0_4 = arith.constant 0 : index
    %2 = vector.load %arg3[%c0_3, %c0_4] : memref<8x32xf32, #tpu.memory_space<vmem>>, vector<8x32xf32>
    %3 = arith.subf %0, %1 : vector<8x32xf32>
    %cst = arith.constant 9.99999997E-7 : f32
    %4 = vector.broadcast %cst : f32 to vector<8x32xf32>
    %5 = arith.addf %3, %4 : vector<8x32xf32>
    %6 = arith.mulf %5, %5 : vector<8x32xf32>
    %cst_5 = arith.constant dense<0.000000e+00> : vector<8xf32>
    %7 = vector.multi_reduction <add>, %6, %cst_5 [1] : vector<8x32xf32> to vector<8xf32>
    %8 = vector.shape_cast %7 : vector<8xf32> to vector<8x1xf32>
    %9 = math.sqrt %8 : vector<8x1xf32>
    %10 = arith.subf %0, %2 : vector<8x32xf32>
    %cst_6 = arith.constant 9.99999997E-7 : f32
    %11 = vector.broadcast %cst_6 : f32 to vector<8x32xf32>
    %12 = arith.addf %10, %11 : vector<8x32xf32>
    %13 = arith.mulf %12, %12 : vector<8x32xf32>
    %cst_7 = arith.constant dense<0.000000e+00> : vector<8xf32>
    %14 = vector.multi_reduction <add>, %13, %cst_7 [1] : vector<8x32xf32> to vector<8xf32>
    %15 = vector.shape_cast %14 : vector<8xf32> to vector<8x1xf32>
    %16 = math.sqrt %15 : vector<8x1xf32>
    %17 = arith.subf %9, %16 : vector<8x1xf32>
    %cst_8 = arith.constant 1.000000e+00 : f32
    %18 = vector.broadcast %cst_8 : f32 to vector<8x1xf32>
    %19 = arith.addf %17, %18 : vector<8x1xf32>
    %cst_9 = arith.constant 0.000000e+00 : f32
    %20 = vector.broadcast %cst_9 : f32 to vector<8x1xf32>
    %21 = arith.maximumf %19, %20 : vector<8x1xf32>
    %22 = vector.shape_cast %21 : vector<8x1xf32> to vector<1x8x1xf32>
    %cst_10 = arith.constant dense<0.000000e+00> : vector<1xf32>
    %23 = vector.multi_reduction <add>, %22, %cst_10 [1, 2] : vector<1x8x1xf32> to vector<1xf32>
    %24 = vector.shape_cast %23 : vector<1xf32> to vector<1x1x1xf32>
    %25 = vector.extract %24[0, 0, 0] : f32 from vector<1x1x1xf32>
    %26 = vector.broadcast %25 : f32 to vector<1x1xf32>
    %c0_11 = arith.constant 0 : index
    %c0_12 = arith.constant 0 : index
    %27 = vector.load %arg4[%c0_11, %c0_12] : memref<1x1xf32, #tpu.memory_space<vmem>>, vector<1x1xf32>
    tpu.vector_store %arg4[%c0_11, %c0_12], %26 {strides = array<i32>} : memref<1x1xf32, #tpu.memory_space<vmem>>, vector<1x1xf32>,
    return
  }
  func.func @transform_0(%arg0: i32) -> (i32, i32) {
    %c0_i32 = arith.constant 0 : i32
    %c0_i32_0 = arith.constant 0 : i32
    return %arg0, %c0_i32 : i32, i32
  }
  func.func @transform_1(%arg0: i32) -> (i32, i32) {
    %c0_i32 = arith.constant 0 : i32
    %c0_i32_0 = arith.constant 0 : i32
    return %arg0, %c0_i32 : i32, i32
  }
  func.func @transform_2(%arg0: i32) -> (i32, i32) {
    %c0_i32 = arith.constant 0 : i32
    %c0_i32_0 = arith.constant 0 : i32
    return %arg0, %c0_i32 : i32, i32
  }
  func.func @transform_3(%arg0: i32) -> (i32, i32) {
    %c0_i32 = arith.constant 0 : i32
    %c0_i32_0 = arith.constant 0 : i32
    return %arg0, %c0_i32 : i32, i32
  }
}

</mosaic_0001>

<llo_original>
// kernel: tpu_custom_call.1
$region0: #{tpu_custom_call.1}
  #allocation0 [shape = 'u32[]', space=smem, size = 0x4, offset = 0x4, fixed_abs, tag = 'smem constant byte address 0x4 - core index']
  #allocation1 [shape = 'u32[144,128]{1,0:T(1,128)}', space=vmem, size = 0x12000, scoped, tag = 'internal scratch']
  %s0 = inlined_call_operand.hbm [shape: f32[8,32], index: 0, kind: input, shape index: {}]
  %s1 = inlined_call_operand.hbm [shape: f32[8,32], index: 1, kind: input, shape index: {}]
  %s2 = inlined_call_operand.hbm [shape: f32[8,32], index: 2, kind: input, shape index: {}]
  %s3 = inlined_call_operand.hbm [shape: f32[1,1], index: 3, kind: output, shape index: {}]
  %s4 = sld [smem:[#allocation0]]
  $region34: #{tpu_custom_call.1} parent=0
    _
  %s6 = ssub.s32 1, %s4
  %s7 = scalar_select 0, %s6, %s4
  $region1: #{tpu_custom_call.1} parent=0
    #allocation2 [shape = 'u8[4096]{0}', space=vmem, size = 0x1000, scoped, tag = 'input window, operand 0, single buffered']
    #allocation3 [shape = 's32[1]{0}', space=sflag, size = 0x4, scoped, tag = 'scoped memory for tpu_custom_call.1']
    #allocation4 [shape = 's32[1]{0}', space=sflag, size = 0x4, scoped, tag = 'scoped memory for tpu_custom_call.1']
    #allocation5 [shape = 'u8[4096]{0}', space=vmem, size = 0x1000, scoped, tag = 'input window, operand 1, single buffered']
    #allocation6 [shape = 's32[1]{0}', space=sflag, size = 0x4, scoped, tag = 'scoped memory for tpu_custom_call.1']
    #allocation7 [shape = 'u8[4096]{0}', space=vmem, size = 0x1000, scoped, tag = 'input window, operand 2, single buffered']
    #allocation8 [shape = 'u8[512]{0}', space=vmem, size = 0x400, scoped, tag = 'output window, operand 0, single buffered']
    %8 = vsyncpa [#allocation3], 0
    %9 = vsyncpa [#allocation6], 0
    %10 = vsyncpa [#allocation4], 0
    // Predicated region
    $region2: #{tpu_custom_call.1} parent=1 // pred_check
      _
    $region3: #{tpu_custom_call.1} parent=1 // pred_check_branch
      %12 = sbr.rel (0) target = $region5
    $region4: #{tpu_custom_call.1} parent=1 // pred_region
      %s14 = ssub.s32 128, 128
      %15 = vsyncadd [#allocation3], %s14
      %s17 = sshll.u32 [#allocation2], 4
      %s18 = int_to_ptr.vmem [resolvable:$true] %s17
      %20 = dma.hbm_to_vmem [thread:$0]  %s0, 128, %s18, [#allocation3]
    $region5: #{tpu_custom_call.1} parent=1 // pred_fallthru
      _
    // Predicated region
    $region6: #{tpu_custom_call.1} parent=1 // pred_check
      _
    $region7: #{tpu_custom_call.1} parent=1 // pred_check_branch
      %22 = sbr.rel (0) target = $region9
    $region8: #{tpu_custom_call.1} parent=1 // pred_region
      %s24 = ssub.s32 128, 128
      %25 = vsyncadd [#allocation6], %s24
      %s27 = sshll.u32 [#allocation5], 4
      %s28 = int_to_ptr.vmem [resolvable:$true] %s27
      %30 = dma.hbm_to_vmem [thread:$0]  %s1, 128, %s28, [#allocation6]
    $region9: #{tpu_custom_call.1} parent=1 // pred_fallthru
      _
    // Predicated region
    $region10: #{tpu_custom_call.1} parent=1 // pred_check
      _
    $region11: #{tpu_custom_call.1} parent=1 // pred_check_branch
      %32 = sbr.rel (0) target = $region13
    $region12: #{tpu_custom_call.1} parent=1 // pred_region
      %s34 = ssub.s32 128, 128
      %35 = vsyncadd [#allocation6], %s34
      %s37 = sshll.u32 [#allocation7], 4
      %s38 = int_to_ptr.vmem [resolvable:$true] %s37
      %40 = dma.hbm_to_vmem [thread:$0]  %s2, 128, %s38, [#allocation6]
    $region13: #{tpu_custom_call.1} parent=1 // pred_fallthru
      _
    // Predicated region
    $region14: #{tpu_custom_call.1} parent=1 // pred_check
      _
    $region15: #{tpu_custom_call.1} parent=1 // pred_check_branch
      %42 = sbr.rel (0) target = $region17
    $region16: #{tpu_custom_call.1} parent=1 // pred_region
      %43 = dma.done [#allocation3], 128
    $region17: #{tpu_custom_call.1} parent=1 // pred_fallthru
      _
    // Predicated region
    $region18: #{tpu_custom_call.1} parent=1 // pred_check
      _
    $region19: #{tpu_custom_call.1} parent=1 // pred_check_branch
      %45 = sbr.rel (0) target = $region21
    $region20: #{tpu_custom_call.1} parent=1 // pred_region
      %46 = dma.done [#allocation6], 128
    $region21: #{tpu_custom_call.1} parent=1 // pred_fallthru
      _
    // Predicated region
    $region22: #{tpu_custom_call.1} parent=1 // pred_check
      _
    $region23: #{tpu_custom_call.1} parent=1 // pred_check_branch
      %48 = sbr.rel (0) target = $region25
    $region24: #{tpu_custom_call.1} parent=1 // pred_region
      %49 = dma.done [#allocation6], 128
    $region25: #{tpu_custom_call.1} parent=1 // pred_fallthru
      _
    %v50 = vld [vmem:[#allocation2] sm:$0xff]
    %v51 = vld [vmem:[#allocation5] sm:$0xff]
    %v52 = vld [vmem:[#allocation7] sm:$0xff]
    %v53 = vsub.f32 %v50, %v51
    %v54 = vadd.f32 %v53, 1e-06
    %v55 = vmul.f32 %v54, %v54
    %vm56 = vcmask 261120
    %v57 = vsel %vm56, %v55, 0.0
    %58 = vadd.xlane.f32.xlu0 %v57
    %v59 = vpop.xlane.xlu0 %58
    %v60 = vrsqrt.pop %v59
    %v61 = vmul.f32 %v59, %v60
    %vm62 = vcmp.eq.f32.partialorder %v59, inf
    %v63 = vsel %vm62, %v59, %v61
    %vm64 = vcmp.eq.f32.partialorder %v59, 0.0
    %v65 = vand.u32 %v59, 2147483648
    %v66 = vsel %vm64, %v65, %v63
    %v67 = vsub.f32 %v50, %v52
    %v68 = vadd.f32 %v67, 1e-06
    %v69 = vmul.f32 %v68, %v68
    %v70 = vsel %vm56, %v69, 0.0
    %71 = vadd.xlane.f32.xlu0 %v70
    %v72 = vpop.xlane.xlu0 %71
    %v73 = vrsqrt.pop %v72
    %v74 = vmul.f32 %v72, %v73
    %vm75 = vcmp.eq.f32.partialorder %v72, inf
    %v76 = vsel %vm75, %v72, %v74
    %vm77 = vcmp.eq.f32.partialorder %v72, 0.0
    %v78 = vand.u32 %v72, 2147483648
    %v79 = vsel %vm77, %v78, %v76
    %v80 = vsub.f32 %v66, %v79
    %v81 = vadd.f32 %v80, 1.0
    %v82 = vmax.f32 %v81, 0.0
    %vm83 = vcmask 7168
    %v84 = vsel %vm83, %v82, 0.0
    %85 = vadd.xlane.f32.xlu0 %v84
    %v86 = vpop.xlane.xlu0 %85
    %v87 = vrot.slane %v86, 4
    %v88 = vadd.f32 %v86, %v87
    %v89 = vrot.slane %v88, 2
    %v90 = vadd.f32 %v88, %v89
    %v91 = vrot.slane %v90, 1
    %v92 = vadd.f32 %v90, %v91
    %s93 = vtos %v92
    %v94 = vstv %s93
    %vm95 = vcmask 0
    %96 = vst.msk [vmem:[#allocation8] sm:$0x1] %vm95, %v94
    // Predicated region
    $region26: #{tpu_custom_call.1} parent=1 // pred_check
      _
    $region27: #{tpu_custom_call.1} parent=1 // pred_check_branch
      %98 = sbr.rel (0) target = $region29
    $region28: #{tpu_custom_call.1} parent=1 // pred_region
      %s100 = ssub.s32 16, 16
      %101 = vsyncadd [#allocation4], %s100
      %s103 = sshll.u32 [#allocation8], 4
      %s104 = int_to_ptr.vmem [resolvable:$true] %s103
      %106 = dma.vmem_to_hbm [thread:$0]  %s104, 16, %s3, [#allocation4]
    $region29: #{tpu_custom_call.1} parent=1 // pred_fallthru
      _
    // Predicated region
    $region30: #{tpu_custom_call.1} parent=1 // pred_check
      _
    $region31: #{tpu_custom_call.1} parent=1 // pred_check_branch
      %108 = sbr.rel (0) target = $region33
    $region32: #{tpu_custom_call.1} parent=1 // pred_region
      %109 = dma.done [#allocation4], 16
    $region33: #{tpu_custom_call.1} parent=1 // pred_fallthru
      _
    %110 = vsyncpa [#allocation3], 1
    %111 = vsyncpa [#allocation6], 1
    %112 = vsyncpa [#allocation4], 1

</llo_original>
